<compile_context>
chip_gen: v7x
topology: tpu7x:2x2x1
jax: 0.10.0
libtpu: 0.0.40
codegen_flags: <defaults>
</compile_context>

<pallas_src>
import functools

import jax
import jax.numpy as jnp
from jax.experimental import pallas as pl
from jax.experimental.pallas import tpu as pltpu


def _muti_learning_kernel(x_ref, t_ref, p_ref, main_ref, proj_ref, *, mxu_dtype):
    # x_ref:    (Bb, N, F)  batch-block of inputs
    # t_ref:    (F, F)      transition matrix (already in MXU dtype)
    # p_ref:    (F, 2)      fused [project_in | project_out] (MXU dtype)
    # main_ref: (Bb, N, N)  (x @ T) @ x^T
    # proj_ref: (Bb, 2, N)  lane-dense fused projections
    Bb, N, F = x_ref.shape
    x = x_ref[...]
    t = t_ref[...]
    p = p_ref[...]
    if mxu_dtype is not None:
        x = x.astype(mxu_dtype)          # t/p cast once in the wrapper

    # Fold batch into M: (Bb, N, F) -> (Bb*N, F). Layout-free when N % 8 == 0.
    x2d = x.reshape(Bb * N, F)

    # x @ transition as one full-M matmul, f32 accumulation on the MXU.
    xt2d = jax.lax.dot_general(
        x2d, t,
        dimension_numbers=(((1,), (0,)), ((), ())),
        preferred_element_type=jnp.float32)
    xt = xt2d.reshape(Bb, N, F)
    if mxu_dtype is not None:
        xt = xt.astype(mxu_dtype)

    # main = (x @ T) @ x^T as a batched last-dim A·B^T contraction (no
    # explicit transpose of the x tile in the kernel body).
    main = jax.lax.dot_general(
        xt, x,
        dimension_numbers=(((2,), (2,)), ((0,), (0,))),
        preferred_element_type=jnp.float32)
    main_ref[...] = main.astype(main_ref.dtype)

    # Fused projections: (Bb*N, F) @ (F, 2), stored lane-dense as (Bb, 2, N).
    proj2d = jax.lax.dot_general(
        x2d, p,
        dimension_numbers=(((1,), (0,)), ((), ())),
        preferred_element_type=jnp.float32)
    proj = proj2d.reshape(Bb, N, 2)
    proj_ref[...] = jnp.swapaxes(proj, 1, 2).astype(proj_ref.dtype)


def _pick_batch_block(B, N, F, in_itemsize, out_itemsize,
                      vmem_budget=20 << 20, min_steps=2):
    """Largest batch block whose VMEM footprint (incl. f32 intermediates) fits,
    while keeping at least `min_steps` grid steps when B allows."""
    per_b = (2 * in_itemsize * N * F                 # input block, double-buffered
             + 2 * out_itemsize * (N * N + 2 * N)    # main + proj out blocks, 2 bufs
             + 4 * (N * F + N * N))                  # f32 intermediates (xt, main)
    resident = 2 * 4 * (F * F + 2 * F)               # T + fused proj weights (2 bufs, f32 bound)
    bb = max(1, (vmem_budget - resident) // max(per_b, 1))
    bb = min(bb, B)
    if B >= min_steps:
        # >= 2 grid steps: both v7x TensorCores busy + DMA/compute overlap.
        bb = min(bb, pl.cdiv(B, min_steps))
    return int(max(1, bb))


def muti_learning(x, transition, project_in, project_out, *, mxu_dtype=None):
    """Pallas implementation of MutiLearning.forward.

    Args:
      x:           (B, N, F)
      transition:  (F, F)
      project_in:  (F, 1)
      project_out: (F, 1)
      mxu_dtype:   optional dtype to feed the MXU (e.g. jnp.bfloat16). f32
                   accumulation is kept; outputs stay in x.dtype.
    Returns:
      (main, x_in, x_out) with shapes (B, N, N), (B, N, 1), (B, N, 1)
    """
    B, N, F = x.shape
    out_dtype = x.dtype
    in_itemsize = jnp.dtype(x.dtype).itemsize
    out_itemsize = jnp.dtype(out_dtype).itemsize

    w_dtype = mxu_dtype if mxu_dtype is not None else transition.dtype
    t_w = transition.astype(w_dtype)
    p_w = jnp.concatenate([project_in, project_out], axis=1).astype(w_dtype)  # (F, 2)

    Bb = _pick_batch_block(B, N, F, in_itemsize, out_itemsize)
    steps = pl.cdiv(B, Bb)
    B_pad = steps * Bb
    x_p = x if B_pad == B else jnp.pad(x, ((0, B_pad - B), (0, 0), (0, 0)))

    kernel = functools.partial(_muti_learning_kernel, mxu_dtype=mxu_dtype)

    out_shape = (
        jax.ShapeDtypeStruct((B_pad, N, N), out_dtype),   # main
        jax.ShapeDtypeStruct((B_pad, 2, N), out_dtype),   # fused proj (lane-dense)
    )

    flops = 2 * B * N * F * F + 2 * B * N * N * F + 2 * B * N * F * 2
    bytes_accessed = (in_itemsize * B * N * F
                      + jnp.dtype(w_dtype).itemsize * (F * F + 2 * F)
                      + out_itemsize * (B * N * N + 2 * B * N))
    cost = pl.CostEstimate(flops=flops, bytes_accessed=bytes_accessed,
                           transcendentals=0)

    main, proj = pl.pallas_call(
        kernel,
        out_shape=out_shape,
        grid_spec=pltpu.PrefetchScalarGridSpec(
            num_scalar_prefetch=0,
            grid=(steps,),
            in_specs=[
                pl.BlockSpec((Bb, N, F), lambda b: (b, 0, 0)),   # x batch-block
                pl.BlockSpec((F, F), lambda b: (0, 0)),           # transition
                pl.BlockSpec((F, 2), lambda b: (0, 0)),           # fused proj W
            ],
            out_specs=[
                pl.BlockSpec((Bb, N, N), lambda b: (b, 0, 0)),    # main
                pl.BlockSpec((Bb, 2, N), lambda b: (b, 0, 0)),    # fused proj
            ],
        ),
        compiler_params=pltpu.CompilerParams(
            dimension_semantics=("parallel",),
            vmem_limit_bytes=32 << 20),
        cost_estimate=cost,
    )(x_p, t_w, p_w)

    main = main[:B]
    proj = proj[:B]
    x_in = proj[:, 0, :][..., None]    # (B, N, 1)
    x_out = proj[:, 1, :][..., None]   # (B, N, 1)
    return main, x_in, x_out


def _reference(x, transition, project_in, project_out):
    hp = jax.lax.Precision.HIGHEST
    x_t = jnp.transpose(x, (0, 2, 1))
    x_in = jnp.matmul(x, project_in, precision=hp)
    x_out = jnp.matmul(x, project_out, precision=hp)
    y = jnp.matmul(x, transition, precision=hp)
    y = jnp.matmul(y, x_t, precision=hp)
    return y, x_in, x_out


if __name__ == "__main__":
    key = jax.random.PRNGKey(0)
    B, N, F = 2, 8, 32   # small shapes: batch=2, nodes/seq=8, fea_dim=32

    k_x, k_t, k_in, k_out = jax.random.split(key, 4)
    x = jax.random.normal(k_x, (B, N, F), dtype=jnp.float32)
    transition = jax.random.normal(k_t, (F, F), dtype=jnp.float32)
    project_in = jax.random.normal(k_in, (F, 1), dtype=jnp.float32)
    project_out = jax.random.normal(k_out, (F, 1), dtype=jnp.float32)

    ref_main, ref_in, ref_out = _reference(x, transition, project_in, project_out)

    # f32 path (matches the PyTorch module's numerics).
    main, x_in, x_out = jax.block_until_ready(
        muti_learning(x, transition, project_in, project_out))
    assert main.shape == (B, N, N) and x_in.shape == (B, N, 1) and x_out.shape == (B, N, 1)
    assert jnp.allclose(main, ref_main, atol=1e-3, rtol=1e-3)
    assert jnp.allclose(x_in, ref_in, atol=1e-3, rtol=1e-3)
    assert jnp.allclose(x_out, ref_out, atol=1e-3, rtol=1e-3)

    # bf16-fed MXU path (perf mode on v5e/v6e/v7x); generous tolerance vs f32 ref.
    main_b, x_in_b, x_out_b = jax.block_until_ready(
        muti_learning(x, transition, project_in, project_out,
                      mxu_dtype=jnp.bfloat16))
    assert jnp.allclose(main_b, ref_main, atol=1.0, rtol=1e-1)
    assert jnp.allclose(x_in_b, ref_in, atol=0.5, rtol=1e-1)
    assert jnp.allclose(x_out_b, ref_out, atol=0.5, rtol=1e-1)

    print("KERNEL_OK")
</pallas_src>

<mosaic_0001>
module attributes {stable_mosaic.version = 11 : i64} {
  func.func @_muti_learning_kernel(%arg0: i32, %arg1: memref<1x8x32xf32, #tpu.memory_space<vmem>>, %arg2: memref<32x32xf32, #tpu.memory_space<vmem>>, %arg3: memref<32x2xf32, #tpu.memory_space<vmem>>, %arg4: memref<1x8x8xf32, #tpu.memory_space<vmem>>, %arg5: memref<1x2x8xf32, #tpu.memory_space<vmem>>) attributes {dimension_semantics = [#tpu.dimension_semantics<parallel>], iteration_bounds = array<i64: 2>, scalar_prefetch = 0 : i64, scratch_operands = 0 : i64, tpu.core_type = #tpu.core_type<tc>, window_params = [{transform_indices = @transform_0, window_bounds = array<i64: 1, 8, 32>}, {pipeline_mode = #tpu.pipeline_mode<synchronous>, transform_indices = @transform_1, window_bounds = array<i64: 32, 32>}, {pipeline_mode = #tpu.pipeline_mode<synchronous>, transform_indices = @transform_2, window_bounds = array<i64: 32, 2>}, {transform_indices = @transform_3, window_bounds = array<i64: 1, 8, 8>}, {transform_indices = @transform_4, window_bounds = array<i64: 1, 2, 8>}]} {
    %c0 = arith.constant 0 : index
    %c0_0 = arith.constant 0 : index
    %c0_1 = arith.constant 0 : index
    %0 = vector.load %arg1[%c0, %c0_0, %c0_1] : memref<1x8x32xf32, #tpu.memory_space<vmem>>, vector<1x8x32xf32>
    %c0_2 = arith.constant 0 : index
    %c0_3 = arith.constant 0 : index
    %1 = vector.load %arg2[%c0_2, %c0_3] : memref<32x32xf32, #tpu.memory_space<vmem>>, vector<32x32xf32>
    %c0_4 = arith.constant 0 : index
    %c0_5 = arith.constant 0 : index
    %2 = vector.load %arg3[%c0_4, %c0_5] : memref<32x2xf32, #tpu.memory_space<vmem>>, vector<32x2xf32>
    %3 = vector.shape_cast %0 : vector<1x8x32xf32> to vector<8x32xf32>
    %cst = arith.constant dense<0.000000e+00> : vector<8x32xf32>
    %4 = tpu.matmul %3, %1, %cst {dimension_numbers = #tpu.dot_dimension_numbers<[1], [0], [0], [1], [0, 0, 1, 1], [], []>} : vector<8x32xf32>, vector<32x32xf32>, vector<8x32xf32> -> vector<8x32xf32>
    %5 = vector.shape_cast %4 : vector<8x32xf32> to vector<1x8x32xf32>
    %cst_6 = arith.constant dense<0.000000e+00> : vector<1x8x8xf32>
    %6 = tpu.matmul %5, %0, %cst_6 {dimension_numbers = #tpu.dot_dimension_numbers<[2], [2], [1], [1], [0, 0, 0, 1, 1, 1], [0], [0]>} : vector<1x8x32xf32>, vector<1x8x32xf32>, vector<1x8x8xf32> -> vector<1x8x8xf32>
    %c0_7 = arith.constant 0 : index
    %c0_8 = arith.constant 0 : index
    %c0_9 = arith.constant 0 : index
    %7 = vector.load %arg4[%c0_7, %c0_8, %c0_9] : memref<1x8x8xf32, #tpu.memory_space<vmem>>, vector<1x8x8xf32>
    tpu.vector_store %arg4[%c0_7, %c0_8, %c0_9], %6 {strides = array<i32>} : memref<1x8x8xf32, #tpu.memory_space<vmem>>, vector<1x8x8xf32>,
    %cst_10 = arith.constant dense<0.000000e+00> : vector<8x2xf32>
    %8 = tpu.matmul %3, %2, %cst_10 {dimension_numbers = #tpu.dot_dimension_numbers<[1], [0], [0], [1], [0, 0, 1, 1], [], []>} : vector<8x32xf32>, vector<32x2xf32>, vector<8x2xf32> -> vector<8x2xf32>
    %9 = vector.shape_cast %8 : vector<8x2xf32> to vector<1x8x2xf32>
    %10 = tpu.transpose %9, [0, 2, 1] : vector<1x8x2xf32> -> vector<1x2x8xf32>
    %c0_11 = arith.constant 0 : index
    %c0_12 = arith.constant 0 : index
    %c0_13 = arith.constant 0 : index
    %11 = vector.load %arg5[%c0_11, %c0_12, %c0_13] : memref<1x2x8xf32, #tpu.memory_space<vmem>>, vector<1x2x8xf32>
    tpu.vector_store %arg5[%c0_11, %c0_12, %c0_13], %10 {strides = array<i32>} : memref<1x2x8xf32, #tpu.memory_space<vmem>>, vector<1x2x8xf32>,
    return
  }
  func.func @transform_0(%arg0: i32) -> (i32, i32, i32) {
    %c0_i32 = arith.constant 0 : i32
    %c0_i32_0 = arith.constant 0 : i32
    %c0_i32_1 = arith.constant 0 : i32
    return %arg0, %c0_i32, %c0_i32_0 : i32, i32, i32
  }
  func.func @transform_1(%arg0: i32) -> (i32, i32) {
    %c0_i32 = arith.constant 0 : i32
    %c0_i32_0 = arith.constant 0 : i32
    %c0_i32_1 = arith.constant 0 : i32
    return %c0_i32, %c0_i32_0 : i32, i32
  }
  func.func @transform_2(%arg0: i32) -> (i32, i32) {
    %c0_i32 = arith.constant 0 : i32
    %c0_i32_0 = arith.constant 0 : i32
    %c0_i32_1 = arith.constant 0 : i32
    return %c0_i32, %c0_i32_0 : i32, i32
  }
  func.func @transform_3(%arg0: i32) -> (i32, i32, i32) {
    %c0_i32 = arith.constant 0 : i32
    %c0_i32_0 = arith.constant 0 : i32
    %c0_i32_1 = arith.constant 0 : i32
    return %arg0, %c0_i32, %c0_i32_0 : i32, i32, i32
  }
  func.func @transform_4(%arg0: i32) -> (i32, i32, i32) {
    %c0_i32 = arith.constant 0 : i32
    %c0_i32_0 = arith.constant 0 : i32
    %c0_i32_1 = arith.constant 0 : i32
    return %arg0, %c0_i32, %c0_i32_0 : i32, i32, i32
  }
}

</mosaic_0001>

<llo_original>
// kernel: tpu_custom_call.1
$region0: #{tpu_custom_call.1}
  #allocation0 [shape = 'u32[]', space=smem, size = 0x4, offset = 0x4, fixed_abs, tag = 'smem constant byte address 0x4 - core index']
  #allocation1 [shape = 'u32[144,128]{1,0:T(1,128)}', space=vmem, size = 0x12000, scoped, tag = 'internal scratch']
  %s0 = inlined_call_operand.hbm [shape: f32[2,8,32], index: 0, kind: input, shape index: {}]
  %s1 = inlined_call_operand.vmem [shape: f32[32,32], index: 1, kind: input, shape index: {}]
  %s2 = inlined_call_operand.vmem [shape: f32[32,2], index: 2, kind: input, shape index: {}]
  %s3 = inlined_call_operand.hbm [shape: f32[2,8,8], index: 3, kind: output, shape index: {0}]
  %s4 = inlined_call_operand.hbm [shape: f32[2,2,8], index: 4, kind: output, shape index: {1}]
  %5 = xla_tuple %s3, %s4
  %s6 = sld [smem:[#allocation0]]
  $region57: #{tpu_custom_call.1} parent=0
    _
  %s8 = ssub.s32 1, %s6
  %s9 = scalar_select 0, %s8, %s6
  $region1: #{tpu_custom_call.1} parent=0
    #allocation2 [shape = 'u8[8192]{0}', space=vmem, size = 0x2000, scoped, tag = 'input window, operand 0']
    #allocation3 [shape = 's32[2]{0}', space=sflag, size = 0x8, scoped, tag = 'scoped memory for tpu_custom_call.1']
    #allocation4 [shape = 's32[2]{0}', space=sflag, size = 0x8, scoped, tag = 'scoped memory for tpu_custom_call.1']
    #allocation5 [shape = 'u8[8192]{0}', space=vmem, size = 0x2000, scoped, tag = 'output window, operand 0']
    #allocation6 [shape = 'u8[2048]{0}', space=vmem, size = 0x800, scoped, tag = 'output window, operand 1']
    #allocation7 [shape = 's32[2]{0}', space=sflag, size = 0x8, scoped, tag = 'scoped memory for tpu_custom_call.1']
    %10 = vsyncpa [#allocation3], 0
    %s11 = scalar_lea.sflag [#allocation3], 1
    %12 = vsyncpa %s11, 0
    %13 = vsyncpa [#allocation4], 0
    %s14 = scalar_lea.sflag [#allocation4], 1
    %15 = vsyncpa %s14, 0
    %16 = vsyncpa [#allocation7], 0
    %s17 = scalar_lea.sflag [#allocation7], 1
    %18 = vsyncpa %s17, 0
    loop: start=0, step=1, limit=4
    $region2: #{tpu_custom_call.1} parent=1 // loop_pre_header
      _
    $region3: #{tpu_custom_call.1} parent=1 // loop_header
      %s20 = sphi 0, %s24
      %p21 = scmp.ge.s32.totalorder %s20, 4
      %s30 = sphi 0, %s32
      %s33 = sphi 0, %s30
      %s34 = sphi 0, %s33
      %s50 = sphi 0, %s34
      %s54 = sphi 0, %s54
      %s56 = sphi 0, %s54
      %s57 = sphi 0, %s56
      %s71 = sphi 0, %s57
      %s75 = sphi 0, %s75
      %s77 = sphi 0, %s75
      %s78 = sphi 0, %s77
      %s92 = sphi 0, %s78
      %s98 = sphi 0, %s100
      %s101 = sphi 0, %s98
      %s102 = sphi 0, %s101
      %s118 = sphi 0, %s102
      %s124 = sphi 0, %s126
      %s127 = sphi 0, %s124
      %s128 = sphi 0, %s127
      %s144 = sphi 0, %s128
    $region4: #{tpu_custom_call.1} parent=1 // loop_header_branch
      %23 = sbr.rel (%p21) target = $region8
    $region5: #{tpu_custom_call.1} parent=1 // loop_body
      %s25 = ssub.s32 %s20, 1
      %s26 = ssub.s32 %s20, 2
      %s27 = sadd.s32 %s20, 1
      %s28 = ssub.s32 %s20, %s27
      %p29 = scmp.eq.s32.totalorder %s28, 0
      %s31 = sadd.s32 %s30, 1
      %s32 = scalar_select %p29, %s30, %s31
      %p35 = pneg %p29
      %p36 = scmp.eq.s32.totalorder %s20, 1
      %p37 = por %p35, %p36
      %p38 = scmp.ne.s32.totalorder %s30, %s33
      %p39 = scmp.eq.s32.totalorder %s20, 0
      %p40 = por %p38, %p39
      %p41 = scmp.ne.s32.totalorder %s30, %s33
      %p42 = scmp.eq.s32.totalorder %s25, 1
      %p43 = por %p41, %p42
      %p44 = scmp.ne.s32.totalorder %s33, %s34
      %p45 = scmp.eq.s32.totalorder %s25, 0
      %p46 = por %p44, %p45
      %p47 = scmp.ne.s32.totalorder %s33, %s34
      %p48 = scmp.eq.s32.totalorder %s26, 1
      %p49 = por %p47, %p48
      %p51 = scmp.ne.s32.totalorder %s34, %s50
      %p52 = scmp.eq.s32.totalorder %s26, 0
      %p53 = por %p51, %p52
      %s55 = sadd.s32 %s54, 1
      %p58 = scmp.eq.s32.totalorder %s20, 1
      %p59 = scmp.ne.s32.totalorder %s54, %s56
      %p60 = scmp.eq.s32.totalorder %s20, 0
      %p61 = por %p59, %p60
      %p62 = scmp.ne.s32.totalorder %s54, %s56
      %p63 = scmp.eq.s32.totalorder %s25, 1
      %p64 = por %p62, %p63
      %p65 = scmp.ne.s32.totalorder %s56, %s57
      %p66 = scmp.eq.s32.totalorder %s25, 0
      %p67 = por %p65, %p66
      %p68 = scmp.ne.s32.totalorder %s56, %s57
      %p69 = scmp.eq.s32.totalorder %s26, 1
      %p70 = por %p68, %p69
      %p72 = scmp.ne.s32.totalorder %s57, %s71
      %p73 = scmp.eq.s32.totalorder %s26, 0
      %p74 = por %p72, %p73
      %s76 = sadd.s32 %s75, 1
      %p79 = scmp.eq.s32.totalorder %s20, 1
      %p80 = scmp.ne.s32.totalorder %s75, %s77
      %p81 = scmp.eq.s32.totalorder %s20, 0
      %p82 = por %p80, %p81
      %p83 = scmp.ne.s32.totalorder %s75, %s77
      %p84 = scmp.eq.s32.totalorder %s25, 1
      %p85 = por %p83, %p84
      %p86 = scmp.ne.s32.totalorder %s77, %s78
      %p87 = scmp.eq.s32.totalorder %s25, 0
      %p88 = por %p86, %p87
      %p89 = scmp.ne.s32.totalorder %s77, %s78
      %p90 = scmp.eq.s32.totalorder %s26, 1
      %p91 = por %p89, %p90
      %p93 = scmp.ne.s32.totalorder %s78, %s92
      %p94 = scmp.eq.s32.totalorder %s26, 0
      %p95 = por %p93, %p94
      %s96 = ssub.s32 %s20, %s27
      %p97 = scmp.eq.s32.totalorder %s96, 0
      %s99 = sadd.s32 %s98, 1
      %s100 = scalar_select %p97, %s98, %s99
      %p103 = pneg %p97
      %p104 = scmp.eq.s32.totalorder %s20, 1
      %p105 = por %p103, %p104
      %p106 = scmp.ne.s32.totalorder %s98, %s101
      %p107 = scmp.eq.s32.totalorder %s20, 0
      %p108 = por %p106, %p107
      %p109 = scmp.ne.s32.totalorder %s98, %s101
      %p110 = scmp.eq.s32.totalorder %s25, 1
      %p111 = por %p109, %p110
      %p112 = scmp.ne.s32.totalorder %s101, %s102
      %p113 = scmp.eq.s32.totalorder %s25, 0
      %p114 = por %p112, %p113
      %p115 = scmp.ne.s32.totalorder %s101, %s102
      %p116 = scmp.eq.s32.totalorder %s26, 1
      %p117 = por %p115, %p116
      %p119 = scmp.ne.s32.totalorder %s102, %s118
      %p120 = scmp.eq.s32.totalorder %s26, 0
      %p121 = por %p119, %p120
      %s122 = ssub.s32 %s20, %s27
      %p123 = scmp.eq.s32.totalorder %s122, 0
      %s125 = sadd.s32 %s124, 1
      %s126 = scalar_select %p123, %s124, %s125
      %p129 = pneg %p123
      %p130 = scmp.eq.s32.totalorder %s20, 1
      %p131 = por %p129, %p130
      %p132 = scmp.ne.s32.totalorder %s124, %s127
      %p133 = scmp.eq.s32.totalorder %s20, 0
      %p134 = por %p132, %p133
      %p135 = scmp.ne.s32.totalorder %s124, %s127
      %p136 = scmp.eq.s32.totalorder %s25, 1
      %p137 = por %p135, %p136
      %p138 = scmp.ne.s32.totalorder %s127, %s128
      %p139 = scmp.eq.s32.totalorder %s25, 0
      %p140 = por %p138, %p139
      %p141 = scmp.ne.s32.totalorder %s127, %s128
      %p142 = scmp.eq.s32.totalorder %s26, 1
      %p143 = por %p141, %p142
      %p145 = scmp.ne.s32.totalorder %s128, %s144
      %p146 = scmp.eq.s32.totalorder %s26, 0
      %p147 = por %p145, %p146
      %p148 = scmp.le.s32.totalorder 1, %s20
      %p149 = scmp.lt.s32.totalorder %s20, 3
      %p150 = pnand %p148, %p149
      %p151 = pneg %p150
      // Predicated region
      $region9: #{tpu_custom_call.1} parent=5 // pred_check
        _
      $region10: #{tpu_custom_call.1} parent=5 // pred_check_branch
        %153 = sbr.rel (%p150) target = $region12
      $region11: #{tpu_custom_call.1} parent=5 // pred_region
        %s154 = ssub.s32 %s20, 1
        // Predicated region
        $region13: #{tpu_custom_call.1} parent=11 // pred_check
          %p155 = pneg %p67
        $region14: #{tpu_custom_call.1} parent=11 // pred_check_branch
          %157 = sbr.rel (%p155) target = $region16
        $region15: #{tpu_custom_call.1} parent=11 // pred_region
          _
        $region16: #{tpu_custom_call.1} parent=11 // pred_fallthru
          _
        // Predicated region
        $region17: #{tpu_custom_call.1} parent=11 // pred_check
          %p158 = pneg %p88
        $region18: #{tpu_custom_call.1} parent=11 // pred_check_branch
          %160 = sbr.rel (%p158) target = $region20
        $region19: #{tpu_custom_call.1} parent=11 // pred_region
          _
        $region20: #{tpu_custom_call.1} parent=11 // pred_fallthru
          _
      $region12: #{tpu_custom_call.1} parent=5 // pred_fallthru
        _
      %p161 = scmp.lt.s32.totalorder %s20, 2
      // Predicated region
      $region21: #{tpu_custom_call.1} parent=5 // pred_check
        %p162 = pneg %p161
      $region22: #{tpu_custom_call.1} parent=5 // pred_check_branch
        %164 = sbr.rel (%p162) target = $region24
      $region23: #{tpu_custom_call.1} parent=5 // pred_region
        // Predicated region
        $region25: #{tpu_custom_call.1} parent=23 // pred_check
          %p165 = pneg %p40
        $region26: #{tpu_custom_call.1} parent=23 // pred_check_branch
          %167 = sbr.rel (%p165) target = $region28
        $region27: #{tpu_custom_call.1} parent=23 // pred_region
          %s168 = sand.u32 %s30, 1
          %s169 = scalar_lea.sflag [#allocation3], %s168
          %s170 = sand.u32 %s30, 1
          %s171 = smul.addr %s170, 8
          %s172 = scalar_lea.vmem [#allocation2], %s171
          %s174 = ssub.s32 128, 128
          %175 = vsyncadd %s169, %s174
          %s176 = smul.addr %s20, 128
          %s177 = scalar_lea.hbm %s0, %s176
          %s179 = sshll.u32 %s172, 4
          %s180 = int_to_ptr.vmem [resolvable:$true] %s179
          %182 = dma.hbm_to_vmem [thread:$0]  %s177, 128, %s180, %s169
        $region28: #{tpu_custom_call.1} parent=23 // pred_fallthru
          _
      $region24: #{tpu_custom_call.1} parent=5 // pred_fallthru
        _
      %p183 = scmp.le.s32.totalorder 1, %s20
      %p184 = scmp.lt.s32.totalorder %s20, 3
      %p185 = pnand %p183, %p184
      %p186 = pneg %p185
      // Predicated region
      $region29: #{tpu_custom_call.1} parent=5 // pred_check
        _
      $region30: #{tpu_custom_call.1} parent=5 // pred_check_branch
        %188 = sbr.rel (%p185) target = $region32
      $region31: #{tpu_custom_call.1} parent=5 // pred_region
        %s189 = ssub.s32 %s20, 1
        %s190 = sand.u32 %s33, 1
        %s191 = scalar_lea.sflag [#allocation3], %s190
        %s192 = sand.u32 %s33, 1
        %s193 = smul.addr %s192, 8
        %s194 = scalar_lea.vmem [#allocation2], %s193
        // Predicated region
        $region33: #{tpu_custom_call.1} parent=31 // pred_check
          %p195 = pneg %p46
        $region34: #{tpu_custom_call.1} parent=31 // pred_check_branch
          %197 = sbr.rel (%p195) target = $region36
        $region35: #{tpu_custom_call.1} parent=31 // pred_region
          %198 = dma.done %s191, 128
        $region36: #{tpu_custom_call.1} parent=31 // pred_fallthru
          _
        %s199 = sand.u32 %s33, 1
        %s200 = scalar_lea.sflag [#allocation3], %s199
        %s201 = sand.u32 %s33, 1
        %s202 = smul.addr %s201, 8
        %s203 = scalar_lea.vmem [#allocation2], %s202
        %p204 = pneg %p46
        %p205 = pneg %p43
        %p206 = pneg %p67
        %p207 = pneg %p64
        %p208 = pneg %p88
        %p209 = pneg %p85
        %p210 = pneg %p114
        %p211 = pneg %p111
        %s212 = sand.u32 %s101, 1
        %s213 = scalar_lea.sflag [#allocation4], %s212
        %s214 = sand.u32 %s101, 1
        %s215 = smul.addr %s214, 8
        %s216 = scalar_lea.vmem [#allocation5], %s215
        %p217 = pneg %p140
        %p218 = pneg %p137
        %s219 = sand.u32 %s127, 1
        %s220 = scalar_lea.sflag [#allocation7], %s219
        %s221 = sand.u32 %s127, 1
        %s222 = smul.addr %s221, 2
        %s223 = scalar_lea.vmem [#allocation6], %s222
        %v224 = vld [vmem:[%s194] sm:$0xff]
        %v225 = vld [vmem:[%s1] sm:$0xff]
        %v226 = vld [vmem:[%s1 + $0x8] sm:$0xff]
        %v227 = vld [vmem:[%s1 + $0x10] sm:$0xff]
        %v228 = vld [vmem:[%s1 + $0x18] sm:$0xff]
        %v229 = vld [vmem:[%s2] sm:$0xff]
        %v230 = vld [vmem:[%s2 + $0x8] sm:$0xff]
        %v231 = vld [vmem:[%s2 + $0x10] sm:$0xff]
        %v232 = vld [vmem:[%s2 + $0x18] sm:$0xff]
        %vm233 = vcmask 261120
        %v235 = vsel %vm233, %v224, 0
        %237 = vmatprep.subr.mxu0 0.0
        %238 = vmatpush1.msra.mxu0 %v225
        %239 = vmatprep.subr.mxu0 0.0
        %240 = vmatpush1.msra.mxu0 %v226
        %241 = vmatprep.subr.mxu0 0.0
        %242 = vmatpush1.msra.mxu0 %v227
        %243 = vmatprep.subr.mxu0 0.0
        %244 = vmatpush1.msra.mxu0 %v228
        %245 = vmatprep.subr.mxu0 0.0
        %246 = vmatpush1.msra.mxu0 0.0
        %247 = vmatprep.subr.mxu0 0.0
        %248 = vmatpush1.msra.mxu0 0.0
        %249 = vmatprep.subr.mxu0 0.0
        %250 = vmatpush1.msra.mxu0 0.0
        %251 = vmatprep.subr.mxu0 0.0
        %252 = vmatpush1.msra.mxu0 0.0
        %253 = vmatprep.subr.mxu0 0.0
        %254 = vmatpush1.msra.mxu0 0.0
        %255 = vmatprep.subr.mxu0 0.0
        %256 = vmatpush1.msra.mxu0 0.0
        %257 = vmatprep.subr.mxu0 0.0
        %258 = vmatpush1.msra.mxu0 0.0
        %259 = vmatprep.subr.mxu0 0.0
        %260 = vmatpush1.msra.mxu0 0.0
        %261 = vmatprep.subr.mxu0 0.0
        %262 = vmatpush1.msra.mxu0 0.0
        %263 = vmatprep.subr.mxu0 0.0
        %264 = vmatpush1.msra.mxu0 0.0
        %265 = vmatprep.subr.mxu0 0.0
        %266 = vmatpush1.msra.mxu0 0.0
        %267 = vmatprep.subr.mxu0 0.0
        %268 = vmatpush1.msra.mxu0 0.0
        %269 = vmatprep.subr.mxu0 0.0
        %270 = vmatpush1.msra.mxu0 0.0
        %271 = vmatprep.subr.mxu0 0.0
        %272 = vmatpush1.msra.mxu0 0.0
        %273 = vmatprep.subr.mxu0 0.0
        %274 = vmatpush1.msra.mxu0 0.0
        %275 = vmatprep.subr.mxu0 0.0
        %276 = vmatpush1.msra.mxu0 0.0
        %277 = vmatprep.subr.mxu0 0.0
        %278 = vmatpush1.msra.mxu0 0.0
        %279 = vmatprep.subr.mxu0 0.0
        %280 = vmatpush1.msra.mxu0 0.0
        %281 = vmatprep.subr.mxu0 0.0
        %282 = vmatpush1.msra.mxu0 0.0
        %283 = vmatprep.subr.mxu0 0.0
        %284 = vmatpush1.msra.mxu0 0.0
        %285 = vmatprep.subr.mxu0 0.0
        %286 = vmatpush1.msra.mxu0 0.0
        %287 = vmatprep.subr.mxu0 0.0
        %288 = vmatpush1.msra.mxu0 0.0
        %289 = vmatprep.subr.mxu0 0.0
        %290 = vmatpush1.msra.mxu0 0.0
        %291 = vmatprep.subr.mxu0 0.0
        %292 = vmatpush1.msra.mxu0 0.0
        %293 = vmatprep.subr.mxu0 0.0
        %294 = vmatpush1.msra.mxu0 0.0
        %295 = vmatprep.subr.mxu0 0.0
        %296 = vmatpush1.msra.mxu0 0.0
        %297 = vmatprep.subr.mxu0 0.0
        %298 = vmatpush1.msra.mxu0 0.0
        %299 = vmatprep.subr.mxu0 0.0
        %300 = vmatpush1.msra.mxu0 0.0
        %301 = vmatprep.mubr.f32.mxu0 0.0
        %302 = vmatmul.mubr.f32.gmra.mrb[0].mxu0 %v235
        %v303 = vpop.f32.mrb[0].mxu0
        %v304 = vadd.f32 0.0, %v303
        %v305 = vpop.f32.mrb[0].mxu0
        %306 = vdwg.mxu0
        %v308 = vsel %vm233, %v304, 0
        %310 = vmatprep.subr.mxu0 0.0
        %311 = vmatpush1.xpose.msra.mxu0 %v235
        %312 = vmatprep.subr.mxu0 0.0
        %313 = vmatpush1.xpose.msra.mxu0 0.0
        %314 = vmatprep.subr.mxu0 0.0
        %315 = vmatpush1.xpose.msra.mxu0 0.0
        %316 = vmatprep.subr.mxu0 0.0
        %317 = vmatpush1.xpose.msra.mxu0 0.0
        %318 = vmatprep.subr.mxu0 0.0
        %319 = vmatpush1.xpose.msra.mxu0 0.0
        %320 = vmatprep.subr.mxu0 0.0
        %321 = vmatpush1.xpose.msra.mxu0 0.0
        %322 = vmatprep.subr.mxu0 0.0
        %323 = vmatpush1.xpose.msra.mxu0 0.0
        %324 = vmatprep.subr.mxu0 0.0
        %325 = vmatpush1.xpose.msra.mxu0 0.0
        %326 = vmatprep.subr.mxu0 0.0
        %327 = vmatpush1.xpose.msra.mxu0 0.0
        %328 = vmatprep.subr.mxu0 0.0
        %329 = vmatpush1.xpose.msra.mxu0 0.0
        %330 = vmatprep.subr.mxu0 0.0
        %331 = vmatpush1.xpose.msra.mxu0 0.0
        %332 = vmatprep.subr.mxu0 0.0
        %333 = vmatpush1.xpose.msra.mxu0 0.0
        %334 = vmatprep.subr.mxu0 0.0
        %335 = vmatpush1.xpose.msra.mxu0 0.0
        %336 = vmatprep.subr.mxu0 0.0
        %337 = vmatpush1.xpose.msra.mxu0 0.0
        %338 = vmatprep.subr.mxu0 0.0
        %339 = vmatpush1.xpose.msra.mxu0 0.0
        %340 = vmatprep.subr.mxu0 0.0
        %341 = vmatpush1.xpose.msra.mxu0 0.0
        %342 = vmatprep.subr.mxu0 0.0
        %343 = vmatpush1.xpose.msra.mxu0 0.0
        %344 = vmatprep.subr.mxu0 0.0
        %345 = vmatpush1.xpose.msra.mxu0 0.0
        %346 = vmatprep.subr.mxu0 0.0
        %347 = vmatpush1.xpose.msra.mxu0 0.0
        %348 = vmatprep.subr.mxu0 0.0
        %349 = vmatpush1.xpose.msra.mxu0 0.0
        %350 = vmatprep.subr.mxu0 0.0
        %351 = vmatpush1.xpose.msra.mxu0 0.0
        %352 = vmatprep.subr.mxu0 0.0
        %353 = vmatpush1.xpose.msra.mxu0 0.0
        %354 = vmatprep.subr.mxu0 0.0
        %355 = vmatpush1.xpose.msra.mxu0 0.0
        %356 = vmatprep.subr.mxu0 0.0
        %357 = vmatpush1.xpose.msra.mxu0 0.0
        %358 = vmatprep.subr.mxu0 0.0
        %359 = vmatpush1.xpose.msra.mxu0 0.0
        %360 = vmatprep.subr.mxu0 0.0
        %361 = vmatpush1.xpose.msra.mxu0 0.0
        %362 = vmatprep.subr.mxu0 0.0
        %363 = vmatpush1.xpose.msra.mxu0 0.0
        %364 = vmatprep.subr.mxu0 0.0
        %365 = vmatpush1.xpose.msra.mxu0 0.0
        %366 = vmatprep.subr.mxu0 0.0
        %367 = vmatpush1.xpose.msra.mxu0 0.0
        %368 = vmatprep.subr.mxu0 0.0
        %369 = vmatpush1.xpose.msra.mxu0 0.0
        %370 = vmatprep.subr.mxu0 0.0
        %371 = vmatpush1.xpose.msra.mxu0 0.0
        %372 = vmatprep.subr.mxu0 0.0
        %373 = vmatpush1.xpose.msra.mxu0 0.0
        %374 = vmatprep.mubr.f32.mxu0 0.0
        %375 = vmatmul.mubr.f32.gmra.mrb[0].mxu0 %v308
        %v376 = vpop.f32.mrb[0].mxu0
        %v377 = vadd.f32 0.0, %v376
        %v378 = vpop.f32.mrb[0].mxu0
        %379 = vdwg.mxu0
        %vm380 = vcmask 64512
        %381 = vst.msk [vmem:[%s216] sm:$0xff] %vm380, %v377
        %382 = vmatprep.subr.mxu0 0.0
        %383 = vmatpush1.msra.mxu0 %v229
        %384 = vmatprep.subr.mxu0 0.0
        %385 = vmatpush1.msra.mxu0 %v230
        %386 = vmatprep.subr.mxu0 0.0
        %387 = vmatpush1.msra.mxu0 %v231
        %388 = vmatprep.subr.mxu0 0.0
        %389 = vmatpush1.msra.mxu0 %v232
        %390 = vmatprep.subr.mxu0 0.0
        %391 = vmatpush1.msra.mxu0 0.0
        %392 = vmatprep.subr.mxu0 0.0
        %393 = vmatpush1.msra.mxu0 0.0
        %394 = vmatprep.subr.mxu0 0.0
        %395 = vmatpush1.msra.mxu0 0.0
        %396 = vmatprep.subr.mxu0 0.0
        %397 = vmatpush1.msra.mxu0 0.0
        %398 = vmatprep.subr.mxu0 0.0
        %399 = vmatpush1.msra.mxu0 0.0
        %400 = vmatprep.subr.mxu0 0.0
        %401 = vmatpush1.msra.mxu0 0.0
        %402 = vmatprep.subr.mxu0 0.0
        %403 = vmatpush1.msra.mxu0 0.0
        %404 = vmatprep.subr.mxu0 0.0
        %405 = vmatpush1.msra.mxu0 0.0
        %406 = vmatprep.subr.mxu0 0.0
        %407 = vmatpush1.msra.mxu0 0.0
        %408 = vmatprep.subr.mxu0 0.0
        %409 = vmatpush1.msra.mxu0 0.0
        %410 = vmatprep.subr.mxu0 0.0
        %411 = vmatpush1.msra.mxu0 0.0
        %412 = vmatprep.subr.mxu0 0.0
        %413 = vmatpush1.msra.mxu0 0.0
        %414 = vmatprep.subr.mxu0 0.0
        %415 = vmatpush1.msra.mxu0 0.0
        %416 = vmatprep.subr.mxu0 0.0
        %417 = vmatpush1.msra.mxu0 0.0
        %418 = vmatprep.subr.mxu0 0.0
        %419 = vmatpush1.msra.mxu0 0.0
        %420 = vmatprep.subr.mxu0 0.0
        %421 = vmatpush1.msra.mxu0 0.0
        %422 = vmatprep.subr.mxu0 0.0
        %423 = vmatpush1.msra.mxu0 0.0
        %424 = vmatprep.subr.mxu0 0.0
        %425 = vmatpush1.msra.mxu0 0.0
        %426 = vmatprep.subr.mxu0 0.0
        %427 = vmatpush1.msra.mxu0 0.0
        %428 = vmatprep.subr.mxu0 0.0
        %429 = vmatpush1.msra.mxu0 0.0
        %430 = vmatprep.subr.mxu0 0.0
        %431 = vmatpush1.msra.mxu0 0.0
        %432 = vmatprep.subr.mxu0 0.0
        %433 = vmatpush1.msra.mxu0 0.0
        %434 = vmatprep.subr.mxu0 0.0
        %435 = vmatpush1.msra.mxu0 0.0
        %436 = vmatprep.subr.mxu0 0.0
        %437 = vmatpush1.msra.mxu0 0.0
        %438 = vmatprep.subr.mxu0 0.0
        %439 = vmatpush1.msra.mxu0 0.0
        %440 = vmatprep.subr.mxu0 0.0
        %441 = vmatpush1.msra.mxu0 0.0
        %442 = vmatprep.subr.mxu0 0.0
        %443 = vmatpush1.msra.mxu0 0.0
        %444 = vmatprep.subr.mxu0 0.0
        %445 = vmatpush1.msra.mxu0 0.0
        %446 = vmatprep.mubr.f32.mxu0 0.0
        %447 = vmatmul.mubr.f32.gmra.mrb[0].mxu0 %v235
        %v448 = vpop.f32.mrb[0].mxu0
        %v449 = vadd.f32 0.0, %v448
        %v450 = vpop.f32.mrb[0].mxu0
        %451 = vdwg.mxu0
        %452 = vxpose.xlu0.b32.start [1/16] %v449, 128
        %453 = vxpose.xlu0.b32.cont [2/16] 0.0, 128
        %454 = vxpose.xlu0.b32.cont [3/16] 0.0, 128
        %455 = vxpose.xlu0.b32.cont [4/16] 0.0, 128
        %456 = vxpose.xlu0.b32.cont [5/16] 0.0, 128
        %457 = vxpose.xlu0.b32.cont [6/16] 0.0, 128
        %458 = vxpose.xlu0.b32.cont [7/16] 0.0, 128
        %459 = vxpose.xlu0.b32.cont [8/16] 0.0, 128
        %460 = vxpose.xlu0.b32.cont [9/16] 0.0, 128
        %461 = vxpose.xlu0.b32.cont [10/16] 0.0, 128
        %462 = vxpose.xlu0.b32.cont [11/16] 0.0, 128
        %463 = vxpose.xlu0.b32.cont [12/16] 0.0, 128
        %464 = vxpose.xlu0.b32.cont [13/16] 0.0, 128
        %465 = vxpose.xlu0.b32.cont [14/16] 0.0, 128
        %466 = vxpose.xlu0.b32.cont [15/16] 0.0, 128
        %467 = vxpose.xlu0.b32.end [16/16] 0.0, 128
        %v468 = vpop.trf.xlu0
        %v469 = vpop.trf.xlu0
        %v470 = vpop.trf.xlu0
        %v471 = vpop.trf.xlu0
        %v472 = vpop.trf.xlu0
        %v473 = vpop.trf.xlu0
        %v474 = vpop.trf.xlu0
        %v475 = vpop.trf.xlu0
        %v476 = vpop.trf.xlu0
        %v477 = vpop.trf.xlu0
        %v478 = vpop.trf.xlu0
        %v479 = vpop.trf.xlu0
        %v480 = vpop.trf.xlu0
        %v481 = vpop.trf.xlu0
        %v482 = vpop.trf.xlu0
        %v483 = vpop.trf.xlu0
        %vm484 = vcmask 58368
        %485 = vst.msk [vmem:[%s223] sm:$0x3] %vm484, %v468
        %s486 = sand.u32 %s101, 1
        %s487 = scalar_lea.sflag [#allocation4], %s486
        %s488 = sand.u32 %s101, 1
        %s489 = smul.addr %s488, 8
        %s490 = scalar_lea.vmem [#allocation5], %s489
        %s491 = sand.u32 %s127, 1
        %s492 = scalar_lea.sflag [#allocation7], %s491
        %s493 = sand.u32 %s127, 1
        %s494 = smul.addr %s493, 2
        %s495 = scalar_lea.vmem [#allocation6], %s494
        // Predicated region
        $region37: #{tpu_custom_call.1} parent=31 // pred_check
          %p496 = pneg %p111
        $region38: #{tpu_custom_call.1} parent=31 // pred_check_branch
          %498 = sbr.rel (%p496) target = $region40
        $region39: #{tpu_custom_call.1} parent=31 // pred_region
          %s500 = ssub.s32 128, 128
          %501 = vsyncadd %s487, %s500
          %s502 = smul.addr %s25, 128
          %s503 = scalar_lea.hbm %s3, %s502
          %s505 = sshll.u32 %s490, 4
          %s506 = int_to_ptr.vmem [resolvable:$true] %s505
          %508 = dma.vmem_to_hbm [thread:$0]  %s506, 128, %s503, %s487
        $region40: #{tpu_custom_call.1} parent=31 // pred_fallthru
          _
        // Predicated region
        $region41: #{tpu_custom_call.1} parent=31 // pred_check
          %p509 = pneg %p137
        $region42: #{tpu_custom_call.1} parent=31 // pred_check_branch
          %511 = sbr.rel (%p509) target = $region44
        $region43: #{tpu_custom_call.1} parent=31 // pred_region
          %s513 = ssub.s32 32, 32
          %514 = vsyncadd %s492, %s513
          %s515 = smul.addr %s25, 32
          %s516 = scalar_lea.hbm %s4, %s515
          %s518 = sshll.u32 %s495, 4
          %s519 = int_to_ptr.vmem [resolvable:$true] %s518
          %521 = dma.vmem_to_hbm [thread:$0]  %s519, 32, %s516, %s492
        $region44: #{tpu_custom_call.1} parent=31 // pred_fallthru
          _
      $region32: #{tpu_custom_call.1} parent=5 // pred_fallthru
        _
      %p522 = scmp.le.s32.totalorder 2, %s20
      // Predicated region
      $region45: #{tpu_custom_call.1} parent=5 // pred_check
        %p523 = pneg %p522
      $region46: #{tpu_custom_call.1} parent=5 // pred_check_branch
        %525 = sbr.rel (%p523) target = $region48
      $region47: #{tpu_custom_call.1} parent=5 // pred_region
        %s526 = ssub.s32 %s20, 2
        // Predicated region
        $region49: #{tpu_custom_call.1} parent=47 // pred_check
          %p527 = pneg %p117
        $region50: #{tpu_custom_call.1} parent=47 // pred_check_branch
          %529 = sbr.rel (%p527) target = $region52
        $region51: #{tpu_custom_call.1} parent=47 // pred_region
          %s530 = sand.u32 %s102, 1
          %s531 = scalar_lea.sflag [#allocation4], %s530
          %s532 = sand.u32 %s102, 1
          %s533 = smul.addr %s532, 8
          %s534 = scalar_lea.vmem [#allocation5], %s533
          %535 = dma.done %s531, 128
        $region52: #{tpu_custom_call.1} parent=47 // pred_fallthru
          _
        // Predicated region
        $region53: #{tpu_custom_call.1} parent=47 // pred_check
          %p536 = pneg %p143
        $region54: #{tpu_custom_call.1} parent=47 // pred_check_branch
          %538 = sbr.rel (%p536) target = $region56
        $region55: #{tpu_custom_call.1} parent=47 // pred_region
          %s539 = sand.u32 %s128, 1
          %s540 = scalar_lea.sflag [#allocation7], %s539
          %s541 = sand.u32 %s128, 1
          %s542 = smul.addr %s541, 2
          %s543 = scalar_lea.vmem [#allocation6], %s542
          %544 = dma.done %s540, 32
        $region56: #{tpu_custom_call.1} parent=47 // pred_fallthru
          _
      $region48: #{tpu_custom_call.1} parent=5 // pred_fallthru
        _
    $region6: #{tpu_custom_call.1} parent=1 // loop_footer
      %s24 = sadd.s32 1, %s20
    $region7: #{tpu_custom_call.1} parent=1 // loop_footer_branch
      %19 = sbr.rel target = $region3
    $region8: #{tpu_custom_call.1} parent=1 // loop_exit
      _
    %545 = vsyncpa [#allocation3], 1
    %s546 = scalar_lea.sflag [#allocation3], 1
    %547 = vsyncpa %s546, 1
    %548 = vsyncpa [#allocation4], 1
    %s549 = scalar_lea.sflag [#allocation4], 1
    %550 = vsyncpa %s549, 1
    %551 = vsyncpa [#allocation7], 1
    %s552 = scalar_lea.sflag [#allocation7], 1
    %553 = vsyncpa %s552, 1

</llo_original>
